<compile_context>
chip_gen: v7x
topology: tpu7x:2x2x1
jax: 0.10.0
libtpu: 0.0.40
codegen_flags: <defaults>
</compile_context>

<pallas_src>
import functools

import numpy as np
import jax
import jax.numpy as jnp
from jax import lax
from jax.experimental import pallas as pl
from jax.experimental.pallas import tpu as pltpu

DATA_DIM = 3          # as in the reference module
HIDDEN_SIZE = 10      # as in the reference module
HID_PAD = 16          # hidden padded to 16 sublanes (f32 sublane multiple)
W_COLS = 128          # weight stack padded to one lane-dense tile
LOG2E = float(np.log2(np.exp(1)))
NEG_BIG = -1e30       # "minus infinity" for masked (padding) columns in the LSE


def _round_up(n, m):
    return (n + m - 1) // m * m


def _cdiv(a, b):
    return -(-a // b)


def mine_kernel(inp_ref, w_ref, o_ref, accj_ref, m_ref, s_ref, *,
                batch_size, tile_b, chunk, n_chunks, masked):
    # inp_ref : (HID_PAD, tile_b) f32  rows 0-2 = x^T, 3-5 = y^T, 6-8 = y_shuf^T, rest 0
    # w_ref   : (HID_PAD, 128)    f32  cols 0-5 = w1^T, col 6 = b1, col 7 = w2
    # o_ref   : (8, 128)          f32  per-split partials (lane 0 = joint sum, 1 = m, 2 = s)
    # accj_ref: (HID_PAD, chunk)  f32  running per-lane sum of relu(h_joint)
    # m_ref/s_ref: (1, chunk)     f32  per-lane online log-sum-exp state (marginal half)
    s_idx = pl.program_id(0)          # core split ("parallel", v7x megacore)
    i = pl.program_id(1)              # row block within the split ("arbitrary")
    n_i = pl.num_programs(1)

    @pl.when(i == 0)
    def _():
        accj_ref[...] = jnp.zeros_like(accj_ref)
        m_ref[...] = jnp.full_like(m_ref, NEG_BIG)
        s_ref[...] = jnp.zeros_like(s_ref)

    w = w_ref[...]
    wx = [w[:, k:k + 1] for k in range(DATA_DIM)]                      # x-half of layer 1
    wy = [w[:, DATA_DIM + k:DATA_DIM + k + 1] for k in range(DATA_DIM)]
    b1c = w[:, 2 * DATA_DIM:2 * DATA_DIM + 1]                          # (16, 1)
    w2c = w[:, 2 * DATA_DIM + 1:2 * DATA_DIM + 2]                      # (16, 1)

    block_col0 = (s_idx * n_i + i) * tile_b

    def process_chunk(lane0, col0):
        sl = pl.ds(lane0, chunk)

        def feat(r):                                     # row r of the stacked inputs
            return inp_ref[pl.ds(r, 1), sl]              # (1, chunk)

        # Layer 1 on the VPU: K=3 broadcast-MACs per half; x-part + b1 shared.
        hx = wx[0] * feat(0) + b1c
        for k in (1, 2):
            hx = hx + wx[k] * feat(k)
        hj = hx
        hm = hx
        for k in range(DATA_DIM):
            hj = hj + wy[k] * feat(DATA_DIM + k)         # joint:    (x, y)
            hm = hm + wy[k] * feat(2 * DATA_DIM + k)     # marginal: (x, y_shuf)
        hj = jnp.maximum(hj, 0.0)
        hm = jnp.maximum(hm, 0.0)

        # Joint half: per-(hidden, lane) running sum; w2 weighting deferred to epilogue.
        if masked:
            colv = col0 + lax.broadcasted_iota(jnp.int32, (HID_PAD, chunk), 1)
            hj = jnp.where(colv < batch_size, hj, 0.0)
        accj_ref[...] += hj

        # Marginal half: per-lane online log-sum-exp of the (bias-free) logits.
        logit = jnp.sum(hm * w2c, axis=0, keepdims=True)               # (1, chunk)
        if masked:
            coll = col0 + lax.broadcasted_iota(jnp.int32, (1, chunk), 1)
            logit = jnp.where(coll < batch_size, logit, NEG_BIG)
        m_old = m_ref[...]
        m_new = jnp.maximum(m_old, logit)
        s_ref[...] = s_ref[...] * jnp.exp(m_old - m_new) + jnp.exp(logit - m_new)
        m_ref[...] = m_new

    if n_chunks == 1:
        process_chunk(0, block_col0)
    else:
        def chunk_body(c, carry):
            lane0 = pl.multiple_of(c * chunk, chunk)
            process_chunk(lane0, block_col0 + c * chunk)
            return carry
        lax.fori_loop(0, n_chunks, chunk_body, 0)

    @pl.when(i == n_i - 1)
    def _():
        # Single cross-lane reduce per split, here in the epilogue only.
        joint_sum = jnp.sum(accj_ref[...] * w2c)                       # scalar
        m = m_ref[...]
        m_part = jnp.max(m)
        s_part = jnp.sum(s_ref[...] * jnp.exp(m - m_part))
        lane = lax.broadcasted_iota(jnp.int32, (8, 128), 1)
        o_ref[...] = jnp.where(lane == 0, joint_sum,
                     jnp.where(lane == 1, m_part,
                     jnp.where(lane == 2, s_part, 0.0)))


def init_params(key, data_dim=DATA_DIM, hidden=HIDDEN_SIZE):
    """Deterministic nn.Linear-style init: U(-1/sqrt(fan_in), 1/sqrt(fan_in))."""
    k1, k2, k3, k4 = jax.random.split(key, 4)
    fan1 = 2 * data_dim
    fan2 = hidden
    w1 = jax.random.uniform(k1, (fan1, hidden), jnp.float32,
                            -1.0 / np.sqrt(fan1), 1.0 / np.sqrt(fan1))
    b1 = jax.random.uniform(k2, (hidden,), jnp.float32,
                            -1.0 / np.sqrt(fan1), 1.0 / np.sqrt(fan1))
    w2 = jax.random.uniform(k3, (hidden, 1), jnp.float32,
                            -1.0 / np.sqrt(fan2), 1.0 / np.sqrt(fan2))
    b2 = jax.random.uniform(k4, (1,), jnp.float32,
                            -1.0 / np.sqrt(fan2), 1.0 / np.sqrt(fan2))
    return w1, b1, w2, b2


def mine_forward(x, y, params, perm_key, *, max_tile=4096, chunk=256):
    """x, y: (batch, data_dim) f32.  Returns the scalar MINE loss (f32)."""
    w1, b1, w2, b2 = params
    batch = x.shape[0]

    # Host-side glue kept minimal: only the random permutation gather.
    # TODO(synk): fuse the permutation gather via scalar-prefetched indices + pl.Element.
    idx = jax.random.permutation(perm_key, batch)
    y_shuf = y[idx]

    chunk = max(128, _round_up(chunk, 128))
    max_tile = max(chunk, (max_tile // chunk) * chunk)
    tile_b = min(max_tile, _round_up(batch, chunk))
    n_blocks = _cdiv(batch, tile_b)
    nsplit = 2 if n_blocks >= 2 else 1          # v7x: shard row blocks over both TCs
    bps = _cdiv(n_blocks, nsplit)               # row blocks per split
    padded_b = nsplit * bps * tile_b
    n_chunks = tile_b // chunk
    masked = padded_b != batch

    # Single stacked, transposed, lane-dense input: one DMA per grid step.
    feats = jnp.concatenate([x, y, y_shuf], axis=1).T.astype(jnp.float32)   # (9, B)
    inp = jnp.pad(feats, ((0, HID_PAD - 3 * DATA_DIM), (0, padded_b - batch)))

    # Tiny stacked weights (hidden padded 10 -> 16 sublanes only; zero padding is
    # exact).  In a training loop, hoist this prep outside the per-step jit.
    wstack = jnp.zeros((HID_PAD, W_COLS), jnp.float32)
    wstack = wstack.at[:HIDDEN_SIZE, 0:2 * DATA_DIM].set(w1.T.astype(jnp.float32))
    wstack = wstack.at[:HIDDEN_SIZE, 2 * DATA_DIM].set(b1.astype(jnp.float32))
    wstack = wstack.at[:HIDDEN_SIZE, 2 * DATA_DIM + 1].set(w2[:, 0].astype(jnp.float32))

    cost = pl.CostEstimate(
        flops=int(4 * batch * (2 * DATA_DIM * HIDDEN_SIZE + HIDDEN_SIZE) + 16 * batch),
        transcendentals=int(batch),
        bytes_accessed=int(inp.size * 4 + wstack.size * 4 + nsplit * 8 * 128 * 4))

    parts = pl.pallas_call(
        functools.partial(mine_kernel, batch_size=batch, tile_b=tile_b,
                          chunk=chunk, n_chunks=n_chunks, masked=masked),
        out_shape=jax.ShapeDtypeStruct((nsplit * 8, 128), jnp.float32),
        grid=(nsplit, bps),
        in_specs=[
            pl.BlockSpec((HID_PAD, tile_b), lambda s, i: (0, s * bps + i)),  # stacked inputs
            pl.BlockSpec((HID_PAD, W_COLS), lambda s, i: (0, 0)),            # stacked weights
        ],
        out_specs=pl.BlockSpec((8, 128), lambda s, i: (s, 0)),
        scratch_shapes=[
            pltpu.VMEM((HID_PAD, chunk), jnp.float32),   # joint running sum
            pltpu.VMEM((1, chunk), jnp.float32),         # LSE running max (per lane)
            pltpu.VMEM((1, chunk), jnp.float32),         # LSE running sum-exp (per lane)
        ],
        compiler_params=pltpu.CompilerParams(
            dimension_semantics=("parallel", "arbitrary"),
            vmem_limit_bytes=32 * 1024 * 1024),
        cost_estimate=cost,
    )(inp, wstack)

    # Tiny host-side combine of the per-split partials (~10 scalar ops).
    head = parts.reshape(nsplit, 8, 128)[:, 0, :]        # (nsplit, 128)
    joint_sum = jnp.sum(head[:, 0])
    m_p = head[:, 1]
    s_p = head[:, 2]
    m_all = jnp.max(m_p)
    s_all = jnp.sum(s_p * jnp.exp(m_p - m_all))
    b2s = b2.reshape(()).astype(jnp.float32)
    mean_xy = joint_sum / batch + b2s                                   # mean(pred_xy)
    log_mean_exp = b2s + m_all + jnp.log(s_all) - jnp.log(float(batch))  # log(mean(exp(pred_x_y)))
    return -LOG2E * (mean_xy - log_mean_exp)


def mine_reference(x, y, params, perm_key):
    """Pure-JAX replica of the PyTorch forward (same permutation key)."""
    w1, b1, w2, b2 = params
    batch = x.shape[0]
    idx = jax.random.permutation(perm_key, batch)
    y_shuf = y[idx]
    inputs = jnp.concatenate([jnp.concatenate([x, x], axis=0),
                              jnp.concatenate([y, y_shuf], axis=0)], axis=1)
    h = jnp.maximum(inputs @ w1 + b1, 0.0)
    logits = h @ w2 + b2
    pred_xy = logits[:batch]
    pred_x_y = logits[batch:]
    return -LOG2E * (jnp.mean(pred_xy) - jnp.log(jnp.mean(jnp.exp(pred_x_y))))


if __name__ == "__main__":
    key = jax.random.PRNGKey(0)
    k_x, k_y, k_param, k_perm = jax.random.split(key, 4)
    params = init_params(k_param)

    # Small demo at the module's natural shapes.
    batch = 8
    x = jax.random.normal(k_x, (batch, DATA_DIM), dtype=jnp.float32)
    y = jax.random.normal(k_y, (batch, DATA_DIM), dtype=jnp.float32)
    loss = jax.jit(mine_forward)(x, y, params, k_perm)
    jax.block_until_ready(loss)
    assert loss.shape == () and loss.dtype == jnp.float32
    ref = mine_reference(x, y, params, k_perm)
    assert np.allclose(np.asarray(loss), np.asarray(ref), rtol=1e-4, atol=1e-4), (
        f"kernel={float(loss)} ref={float(ref)}")

    # Larger batches: exercise the in-kernel chunk loop, the column masking and
    # the 2-way ("parallel") per-core partial-reduction path.
    for big in (700, 5000):
        kx2, ky2, kp2 = jax.random.split(jax.random.fold_in(key, big), 3)
        xb = jax.random.normal(kx2, (big, DATA_DIM), dtype=jnp.float32)
        yb = jax.random.normal(ky2, (big, DATA_DIM), dtype=jnp.float32)
        lb = jax.jit(mine_forward)(xb, yb, params, kp2)
        jax.block_until_ready(lb)
        rb = mine_reference(xb, yb, params, kp2)
        assert np.allclose(np.asarray(lb), np.asarray(rb), rtol=1e-3, atol=1e-3), (
            f"batch={big}: kernel={float(lb)} ref={float(rb)}")

    print("KERNEL_OK")
</pallas_src>

<mosaic_0001>
module attributes {stable_mosaic.version = 11 : i64} {
  func.func @mine_kernel(%arg0: i32, %arg1: i32, %arg2: memref<16x256xf32, #tpu.memory_space<vmem>>, %arg3: memref<16x128xf32, #tpu.memory_space<vmem>>, %arg4: memref<8x128xf32, #tpu.memory_space<vmem>>, %arg5: memref<16x256xf32, #tpu.memory_space<vmem>>, %arg6: memref<1x256xf32, #tpu.memory_space<vmem>>, %arg7: memref<1x256xf32, #tpu.memory_space<vmem>>) attributes {dimension_semantics = [#tpu.dimension_semantics<parallel>, #tpu.dimension_semantics<arbitrary>], iteration_bounds = array<i64: 1, 1>, scalar_prefetch = 0 : i64, scratch_operands = 3 : i64, tpu.core_type = #tpu.core_type<tc>, window_params = [{transform_indices = @transform_0, window_bounds = array<i64: 16, 256>}, {pipeline_mode = #tpu.pipeline_mode<synchronous>, transform_indices = @transform_1, window_bounds = array<i64: 16, 128>}, {transform_indices = @transform_2, window_bounds = array<i64: 8, 128>}]} {
    %c0_i32 = arith.constant 0 : i32
    %0 = arith.cmpi eq, %arg1, %c0_i32 : i32
    %1 = arith.extui %0 : i1 to i32
    %c0_i32_0 = arith.constant 0 : i32
    %2 = arith.cmpi ne, %1, %c0_i32_0 : i32
    scf.if %2 {
      %cst_31 = arith.constant 0.000000e+00 : f32
      %100 = vector.broadcast %cst_31 : f32 to vector<16x256xf32>
      %c0_32 = arith.constant 0 : index
      %c0_33 = arith.constant 0 : index
      %101 = vector.load %arg5[%c0_32, %c0_33] : memref<16x256xf32, #tpu.memory_space<vmem>>, vector<16x256xf32>
      tpu.vector_store %arg5[%c0_32, %c0_33], %100 {strides = array<i32>} : memref<16x256xf32, #tpu.memory_space<vmem>>, vector<16x256xf32>,
      %cst_34 = arith.constant -1.000000e+30 : f32
      %102 = vector.broadcast %cst_34 : f32 to vector<1x256xf32>
      %c0_35 = arith.constant 0 : index
      %c0_36 = arith.constant 0 : index
      %103 = vector.load %arg6[%c0_35, %c0_36] : memref<1x256xf32, #tpu.memory_space<vmem>>, vector<1x256xf32>
      tpu.vector_store %arg6[%c0_35, %c0_36], %102 {strides = array<i32>} : memref<1x256xf32, #tpu.memory_space<vmem>>, vector<1x256xf32>,
      %cst_37 = arith.constant 0.000000e+00 : f32
      %104 = vector.broadcast %cst_37 : f32 to vector<1x256xf32>
      %c0_38 = arith.constant 0 : index
      %c0_39 = arith.constant 0 : index
      %105 = vector.load %arg7[%c0_38, %c0_39] : memref<1x256xf32, #tpu.memory_space<vmem>>, vector<1x256xf32>
      tpu.vector_store %arg7[%c0_38, %c0_39], %104 {strides = array<i32>} : memref<1x256xf32, #tpu.memory_space<vmem>>, vector<1x256xf32>,
    } else {
    }
    %c0 = arith.constant 0 : index
    %c0_1 = arith.constant 0 : index
    %3 = vector.load %arg3[%c0, %c0_1] : memref<16x128xf32, #tpu.memory_space<vmem>>, vector<16x128xf32>
    %4 = vector.extract_strided_slice %3 {offsets = [0, 0], sizes = [16, 1], strides = [1, 1]} : vector<16x128xf32> to vector<16x1xf32>
    %5 = vector.extract_strided_slice %3 {offsets = [0, 1], sizes = [16, 1], strides = [1, 1]} : vector<16x128xf32> to vector<16x1xf32>
    %6 = vector.extract_strided_slice %3 {offsets = [0, 2], sizes = [16, 1], strides = [1, 1]} : vector<16x128xf32> to vector<16x1xf32>
    %7 = vector.extract_strided_slice %3 {offsets = [0, 3], sizes = [16, 1], strides = [1, 1]} : vector<16x128xf32> to vector<16x1xf32>
    %8 = vector.extract_strided_slice %3 {offsets = [0, 4], sizes = [16, 1], strides = [1, 1]} : vector<16x128xf32> to vector<16x1xf32>
    %9 = vector.extract_strided_slice %3 {offsets = [0, 5], sizes = [16, 1], strides = [1, 1]} : vector<16x128xf32> to vector<16x1xf32>
    %10 = vector.extract_strided_slice %3 {offsets = [0, 6], sizes = [16, 1], strides = [1, 1]} : vector<16x128xf32> to vector<16x1xf32>
    %11 = vector.extract_strided_slice %3 {offsets = [0, 7], sizes = [16, 1], strides = [1, 1]} : vector<16x128xf32> to vector<16x1xf32>
    %c1_i32 = arith.constant 1 : i32
    %12 = arith.muli %arg0, %c1_i32 : i32
    %13 = arith.addi %12, %arg1 : i32
    %c256_i32 = arith.constant 256 : i32
    %14 = arith.muli %13, %c256_i32 : i32
    %c0_2 = arith.constant 0 : index
    %c0_3 = arith.constant 0 : index
    %15 = vector.load %arg2[%c0_2, %c0_3] : memref<16x256xf32, #tpu.memory_space<vmem>>, vector<1x256xf32>
    %16 = vector.broadcast %4 : vector<16x1xf32> to vector<16x256xf32>
    %17 = vector.broadcast %15 : vector<1x256xf32> to vector<16x256xf32>
    %18 = arith.mulf %16, %17 : vector<16x256xf32>
    %19 = vector.broadcast %10 : vector<16x1xf32> to vector<16x256xf32>
    %20 = arith.addf %18, %19 : vector<16x256xf32>
    %c1 = arith.constant 1 : index
    %c0_4 = arith.constant 0 : index
    %21 = vector.load %arg2[%c1, %c0_4] : memref<16x256xf32, #tpu.memory_space<vmem>>, vector<1x256xf32>
    %22 = vector.broadcast %5 : vector<16x1xf32> to vector<16x256xf32>
    %23 = vector.broadcast %21 : vector<1x256xf32> to vector<16x256xf32>
    %24 = arith.mulf %22, %23 : vector<16x256xf32>
    %25 = arith.addf %20, %24 : vector<16x256xf32>
    %c2 = arith.constant 2 : index
    %c0_5 = arith.constant 0 : index
    %26 = vector.load %arg2[%c2, %c0_5] : memref<16x256xf32, #tpu.memory_space<vmem>>, vector<1x256xf32>
    %27 = vector.broadcast %6 : vector<16x1xf32> to vector<16x256xf32>
    %28 = vector.broadcast %26 : vector<1x256xf32> to vector<16x256xf32>
    %29 = arith.mulf %27, %28 : vector<16x256xf32>
    %30 = arith.addf %25, %29 : vector<16x256xf32>
    %c3 = arith.constant 3 : index
    %c0_6 = arith.constant 0 : index
    %31 = vector.load %arg2[%c3, %c0_6] : memref<16x256xf32, #tpu.memory_space<vmem>>, vector<1x256xf32>
    %32 = vector.broadcast %7 : vector<16x1xf32> to vector<16x256xf32>
    %33 = vector.broadcast %31 : vector<1x256xf32> to vector<16x256xf32>
    %34 = arith.mulf %32, %33 : vector<16x256xf32>
    %35 = arith.addf %30, %34 : vector<16x256xf32>
    %c6 = arith.constant 6 : index
    %c0_7 = arith.constant 0 : index
    %36 = vector.load %arg2[%c6, %c0_7] : memref<16x256xf32, #tpu.memory_space<vmem>>, vector<1x256xf32>
    %37 = vector.broadcast %7 : vector<16x1xf32> to vector<16x256xf32>
    %38 = vector.broadcast %36 : vector<1x256xf32> to vector<16x256xf32>
    %39 = arith.mulf %37, %38 : vector<16x256xf32>
    %40 = arith.addf %30, %39 : vector<16x256xf32>
    %c4 = arith.constant 4 : index
    %c0_8 = arith.constant 0 : index
    %41 = vector.load %arg2[%c4, %c0_8] : memref<16x256xf32, #tpu.memory_space<vmem>>, vector<1x256xf32>
    %42 = vector.broadcast %8 : vector<16x1xf32> to vector<16x256xf32>
    %43 = vector.broadcast %41 : vector<1x256xf32> to vector<16x256xf32>
    %44 = arith.mulf %42, %43 : vector<16x256xf32>
    %45 = arith.addf %35, %44 : vector<16x256xf32>
    %c7 = arith.constant 7 : index
    %c0_9 = arith.constant 0 : index
    %46 = vector.load %arg2[%c7, %c0_9] : memref<16x256xf32, #tpu.memory_space<vmem>>, vector<1x256xf32>
    %47 = vector.broadcast %8 : vector<16x1xf32> to vector<16x256xf32>
    %48 = vector.broadcast %46 : vector<1x256xf32> to vector<16x256xf32>
    %49 = arith.mulf %47, %48 : vector<16x256xf32>
    %50 = arith.addf %40, %49 : vector<16x256xf32>
    %c5 = arith.constant 5 : index
    %c0_10 = arith.constant 0 : index
    %51 = vector.load %arg2[%c5, %c0_10] : memref<16x256xf32, #tpu.memory_space<vmem>>, vector<1x256xf32>
    %52 = vector.broadcast %9 : vector<16x1xf32> to vector<16x256xf32>
    %53 = vector.broadcast %51 : vector<1x256xf32> to vector<16x256xf32>
    %54 = arith.mulf %52, %53 : vector<16x256xf32>
    %55 = arith.addf %45, %54 : vector<16x256xf32>
    %c8 = arith.constant 8 : index
    %c0_11 = arith.constant 0 : index
    %56 = vector.load %arg2[%c8, %c0_11] : memref<16x256xf32, #tpu.memory_space<vmem>>, vector<1x256xf32>
    %57 = vector.broadcast %9 : vector<16x1xf32> to vector<16x256xf32>
    %58 = vector.broadcast %56 : vector<1x256xf32> to vector<16x256xf32>
    %59 = arith.mulf %57, %58 : vector<16x256xf32>
    %60 = arith.addf %50, %59 : vector<16x256xf32>
    %cst = arith.constant 0.000000e+00 : f32
    %61 = vector.broadcast %cst : f32 to vector<16x256xf32>
    %62 = arith.maximumf %55, %61 : vector<16x256xf32>
    %cst_12 = arith.constant 0.000000e+00 : f32
    %63 = vector.broadcast %cst_12 : f32 to vector<16x256xf32>
    %64 = arith.maximumf %60, %63 : vector<16x256xf32>
    %65 = tpu.iota {dimensions = array<i32: 1>} : vector<16x256xi32>
    %66 = vector.broadcast %14 : i32 to vector<16x256xi32>
    %67 = arith.addi %66, %65 : vector<16x256xi32>
    %c8_i32 = arith.constant 8 : i32
    %68 = vector.broadcast %c8_i32 : i32 to vector<16x256xi32>
    %69 = arith.cmpi slt, %67, %68 : vector<16x256xi32>
    %cst_13 = arith.constant 0.000000e+00 : f32
    %70 = vector.broadcast %cst_13 : f32 to vector<16x256xf32>
    %71 = arith.select %69, %62, %70 : vector<16x256xi1>, vector<16x256xf32>
    %c0_14 = arith.constant 0 : index
    %c0_15 = arith.constant 0 : index
    %72 = vector.load %arg5[%c0_14, %c0_15] : memref<16x256xf32, #tpu.memory_space<vmem>>, vector<16x256xf32>
    %73 = arith.addf %72, %71 : vector<16x256xf32>
    %c0_16 = arith.constant 0 : index
    %c0_17 = arith.constant 0 : index
    %74 = vector.load %arg5[%c0_16, %c0_17] : memref<16x256xf32, #tpu.memory_space<vmem>>, vector<16x256xf32>
    tpu.vector_store %arg5[%c0_16, %c0_17], %73 {strides = array<i32>} : memref<16x256xf32, #tpu.memory_space<vmem>>, vector<16x256xf32>,
    %75 = vector.broadcast %11 : vector<16x1xf32> to vector<16x256xf32>
    %76 = arith.mulf %64, %75 : vector<16x256xf32>
    %cst_18 = arith.constant dense<0.000000e+00> : vector<256xf32>
    %77 = vector.multi_reduction <add>, %76, %cst_18 [0] : vector<16x256xf32> to vector<256xf32>
    %78 = vector.shape_cast %77 : vector<256xf32> to vector<1x256xf32>
    %79 = tpu.iota {dimensions = array<i32: 1>} : vector<1x256xi32>
    %80 = vector.broadcast %14 : i32 to vector<1x256xi32>
    %81 = arith.addi %80, %79 : vector<1x256xi32>
    %c8_i32_19 = arith.constant 8 : i32
    %82 = vector.broadcast %c8_i32_19 : i32 to vector<1x256xi32>
    %83 = arith.cmpi slt, %81, %82 : vector<1x256xi32>
    %cst_20 = arith.constant -1.000000e+30 : f32
    %84 = vector.broadcast %cst_20 : f32 to vector<1x256xf32>
    %85 = arith.select %83, %78, %84 : vector<1x256xi1>, vector<1x256xf32>
    %c0_21 = arith.constant 0 : index
    %c0_22 = arith.constant 0 : index
    %86 = vector.load %arg6[%c0_21, %c0_22] : memref<1x256xf32, #tpu.memory_space<vmem>>, vector<1x256xf32>
    %87 = arith.maximumf %86, %85 : vector<1x256xf32>
    %c0_23 = arith.constant 0 : index
    %c0_24 = arith.constant 0 : index
    %88 = vector.load %arg7[%c0_23, %c0_24] : memref<1x256xf32, #tpu.memory_space<vmem>>, vector<1x256xf32>
    %89 = arith.subf %86, %87 : vector<1x256xf32>
    %90 = math.exp %89 : vector<1x256xf32>
    %91 = arith.mulf %88, %90 : vector<1x256xf32>
    %92 = arith.subf %85, %87 : vector<1x256xf32>
    %93 = math.exp %92 : vector<1x256xf32>
    %94 = arith.addf %91, %93 : vector<1x256xf32>
    %c0_25 = arith.constant 0 : index
    %c0_26 = arith.constant 0 : index
    %95 = vector.load %arg7[%c0_25, %c0_26] : memref<1x256xf32, #tpu.memory_space<vmem>>, vector<1x256xf32>
    tpu.vector_store %arg7[%c0_25, %c0_26], %94 {strides = array<i32>} : memref<1x256xf32, #tpu.memory_space<vmem>>, vector<1x256xf32>,
    %c0_27 = arith.constant 0 : index
    %c0_28 = arith.constant 0 : index
    %96 = vector.load %arg6[%c0_27, %c0_28] : memref<1x256xf32, #tpu.memory_space<vmem>>, vector<1x256xf32>
    tpu.vector_store %arg6[%c0_27, %c0_28], %87 {strides = array<i32>} : memref<1x256xf32, #tpu.memory_space<vmem>>, vector<1x256xf32>,
    %c0_i32_29 = arith.constant 0 : i32
    %97 = arith.cmpi eq, %arg1, %c0_i32_29 : i32
    %98 = arith.extui %97 : i1 to i32
    %c0_i32_30 = arith.constant 0 : i32
    %99 = arith.cmpi ne, %98, %c0_i32_30 : i32
    scf.if %99 {
      %c0_31 = arith.constant 0 : index
      %c0_32 = arith.constant 0 : index
      %100 = vector.load %arg5[%c0_31, %c0_32] : memref<16x256xf32, #tpu.memory_space<vmem>>, vector<16x256xf32>
      %101 = vector.broadcast %11 : vector<16x1xf32> to vector<16x256xf32>
      %102 = arith.mulf %100, %101 : vector<16x256xf32>
      %103 = vector.shape_cast %102 : vector<16x256xf32> to vector<1x16x256xf32>
      %cst_33 = arith.constant dense<0.000000e+00> : vector<1xf32>
      %104 = vector.multi_reduction <add>, %103, %cst_33 [1, 2] : vector<1x16x256xf32> to vector<1xf32>
      %105 = vector.shape_cast %104 : vector<1xf32> to vector<1x1x1xf32>
      %106 = vector.extract %105[0, 0, 0] : f32 from vector<1x1x1xf32>
      %c0_34 = arith.constant 0 : index
      %c0_35 = arith.constant 0 : index
      %107 = vector.load %arg6[%c0_34, %c0_35] : memref<1x256xf32, #tpu.memory_space<vmem>>, vector<1x256xf32>
      %108 = vector.shape_cast %107 : vector<1x256xf32> to vector<1x1x256xf32>
      %cst_36 = arith.constant dense<0xFF800000> : vector<1xf32>
      %109 = vector.multi_reduction <maximumf>, %108, %cst_36 [1, 2] : vector<1x1x256xf32> to vector<1xf32>
      %110 = vector.shape_cast %109 : vector<1xf32> to vector<1x1x1xf32>
      %111 = vector.extract %110[0, 0, 0] : f32 from vector<1x1x1xf32>
      %c0_37 = arith.constant 0 : index
      %c0_38 = arith.constant 0 : index
      %112 = vector.load %arg7[%c0_37, %c0_38] : memref<1x256xf32, #tpu.memory_space<vmem>>, vector<1x256xf32>
      %113 = vector.broadcast %111 : f32 to vector<1x256xf32>
      %114 = arith.subf %107, %113 : vector<1x256xf32>
      %115 = math.exp %114 : vector<1x256xf32>
      %116 = arith.mulf %112, %115 : vector<1x256xf32>
      %117 = vector.shape_cast %116 : vector<1x256xf32> to vector<1x1x256xf32>
      %cst_39 = arith.constant dense<0.000000e+00> : vector<1xf32>
      %118 = vector.multi_reduction <add>, %117, %cst_39 [1, 2] : vector<1x1x256xf32> to vector<1xf32>
      %119 = vector.shape_cast %118 : vector<1xf32> to vector<1x1x1xf32>
      %120 = vector.extract %119[0, 0, 0] : f32 from vector<1x1x1xf32>
      %121 = tpu.iota {dimensions = array<i32: 1>} : vector<8x128xi32>
      %c0_i32_40 = arith.constant 0 : i32
      %122 = vector.broadcast %c0_i32_40 : i32 to vector<8x128xi32>
      %123 = arith.cmpi eq, %121, %122 : vector<8x128xi32>
      %c1_i32_41 = arith.constant 1 : i32
      %124 = vector.broadcast %c1_i32_41 : i32 to vector<8x128xi32>
      %125 = arith.cmpi eq, %121, %124 : vector<8x128xi32>
      %c2_i32 = arith.constant 2 : i32
      %126 = vector.broadcast %c2_i32 : i32 to vector<8x128xi32>
      %127 = arith.cmpi eq, %121, %126 : vector<8x128xi32>
      %cst_42 = arith.constant 0.000000e+00 : f32
      %128 = vector.broadcast %120 : f32 to vector<8x128xf32>
      %129 = vector.broadcast %cst_42 : f32 to vector<8x128xf32>
      %130 = arith.select %127, %128, %129 : vector<8x128xi1>, vector<8x128xf32>
      %131 = vector.broadcast %111 : f32 to vector<8x128xf32>
      %132 = arith.select %125, %131, %130 : vector<8x128xi1>, vector<8x128xf32>
      %133 = vector.broadcast %106 : f32 to vector<8x128xf32>
      %134 = arith.select %123, %133, %132 : vector<8x128xi1>, vector<8x128xf32>
      %c0_43 = arith.constant 0 : index
      %c0_44 = arith.constant 0 : index
      %135 = vector.load %arg4[%c0_43, %c0_44] : memref<8x128xf32, #tpu.memory_space<vmem>>, vector<8x128xf32>
      tpu.vector_store %arg4[%c0_43, %c0_44], %134 {strides = array<i32>} : memref<8x128xf32, #tpu.memory_space<vmem>>, vector<8x128xf32>,
    } else {
    }
    return
  }
  func.func @transform_0(%arg0: i32, %arg1: i32) -> (i32, i32) {
    %c1_i32 = arith.constant 1 : i32
    %0 = arith.muli %arg0, %c1_i32 : i32
    %1 = arith.addi %0, %arg1 : i32
    %c0_i32 = arith.constant 0 : i32
    %c0_i32_0 = arith.constant 0 : i32
    return %c0_i32, %1 : i32, i32
  }
  func.func @transform_1(%arg0: i32, %arg1: i32) -> (i32, i32) {
    %c0_i32 = arith.constant 0 : i32
    %c0_i32_0 = arith.constant 0 : i32
    %c0_i32_1 = arith.constant 0 : i32
    return %c0_i32, %c0_i32_0 : i32, i32
  }
  func.func @transform_2(%arg0: i32, %arg1: i32) -> (i32, i32) {
    %c0_i32 = arith.constant 0 : i32
    %c0_i32_0 = arith.constant 0 : i32
    return %arg0, %c0_i32 : i32, i32
  }
}

</mosaic_0001>

<llo_original>
// kernel: mine_forward.1
$region0: #{mine_forward.1}
  #allocation0 [shape = 'u32[]', space=smem, size = 0x4, offset = 0x4, fixed_abs, tag = 'smem constant byte address 0x4 - core index']
  #allocation1 [shape = 'u32[144,128]{1,0:T(1,128)}', space=vmem, size = 0x12000, scoped, tag = 'internal scratch']
  #allocation2 [shape = 'f32[16,256]{1,0:T(8,128)}', space=vmem, size = 0x4000, scoped, tag = 'scratch operand']
  #allocation3 [shape = 'f32[1,256]{1,0:T(1,128)}', space=vmem, size = 0x400, scoped, tag = 'scratch operand']
  #allocation4 [shape = 'f32[1,256]{1,0:T(1,128)}', space=vmem, size = 0x400, scoped, tag = 'scratch operand']
  %s0 = inlined_call_operand.vmem [shape: f32[16,256], index: 0, kind: input, shape index: {}]
  %s1 = inlined_call_operand.vmem [shape: f32[16,128], index: 1, kind: input, shape index: {}]
  %s2 = inlined_call_operand.vmem [shape: f32[8,128], index: 2, kind: output, shape index: {}]
  %s3 = sld [smem:[#allocation0]]
  $region26: #{mine_forward.1} parent=0
    _
  %s5 = ssub.s32 1, %s3
  %s6 = scalar_select 0, %s5, %s3
  // Predicated region
  $region2: #{mine_forward.1} parent=0 // pred_check
    _
  $region3: #{mine_forward.1} parent=0 // pred_check_branch
    %8 = sbr.rel (0) target = $region5
  $region4: #{mine_forward.1} parent=0 // pred_region
    %s9 = sadd.s32 0, 0
    %s10 = smul.u32 2, %s9
    %p11 = scmp.lt.s32.totalorder %s10, 1
    %s12 = scalar_select %p11, %s10, 1
    %s13 = smul.addr %s12, 8
    %s14 = scalar_lea.vmem %s0, %s13
    %s15 = sadd.s32 0, 0
    %s16 = smul.u32 2, %s15
  $region5: #{mine_forward.1} parent=0 // pred_fallthru
    _
  // Predicated region
  $region6: #{mine_forward.1} parent=0 // pred_check
    _
  $region7: #{mine_forward.1} parent=0 // pred_check_branch
    %18 = sbr.rel (0) target = $region9
  $region8: #{mine_forward.1} parent=0 // pred_region
    _
  $region9: #{mine_forward.1} parent=0 // pred_fallthru
    _
  %s19 = sadd.s32 0, 0
  %s20 = smul.u32 2, %s19
  %p21 = scmp.lt.s32.totalorder %s20, 1
  %s22 = scalar_select %p21, %s20, 1
  %s23 = smul.addr %s22, 8
  %s24 = scalar_lea.vmem %s0, %s23
  %s25 = sadd.s32 0, 0
  %s26 = smul.u32 2, %s25
  %p27 = scmp.lt.s32.totalorder %s26, 1
  %s28 = scalar_select %p27, %s26, 1
  %s29 = smul.addr %s28, 8
  %s30 = scalar_lea.vmem %s0, %s29
  %s31 = sadd.s32 0, 0
  %s32 = smul.u32 2, %s31
  %p33 = scmp.eq.s32.totalorder 0, 0
  // Predicated region
  $region10: #{mine_forward.1} parent=0 // pred_check
    %p34 = pneg %p33
  $region11: #{mine_forward.1} parent=0 // pred_check_branch
    %36 = sbr.rel (%p34) target = $region13
  $region12: #{mine_forward.1} parent=0 // pred_region
    %37 = vst [vmem:[#allocation2] sm:$0xff] 0.0
    %38 = vst [vmem:[#allocation2 + $0x8] sm:$0xff] 0.0
    %39 = vst [vmem:[#allocation2 + $0x10] sm:$0xff] 0.0
    %40 = vst [vmem:[#allocation2 + $0x18] sm:$0xff] 0.0
    %v41 = vlaneseq
    %vm42 = vcmp.ge.s32.totalorder %v41, 0
    %vm43 = vcmp.lt.s32.totalorder %v41, 256
    %vm44 = vmand %vm42, %vm43
    %45 = vst.msk [vmem:[#allocation3] sm:$0x3] %vm44, -1e+30
    %46 = vst.msk [vmem:[#allocation4] sm:$0x3] %vm44, 0.0
  $region13: #{mine_forward.1} parent=0 // pred_fallthru
    _
  %v47 = vld [vmem:[%s1] sm:$0xff]
  %v48 = vld [vmem:[%s1 + $0x8] sm:$0xff]
  %s49 = sadd.s32 0, 0
  %s50 = smul.u32 %s49, 256
  %v51 = vld [vmem:[%s30] ss:$8 sm:$0x3]
  %53 = vset.pattern.permute.xlu0 0
  %54 = vperm.xlu0 %53, %v47
  %v55 = vpop.permute.xlu0 %54
  %58 = vset.pattern.permute.xlu0 0
  %59 = vperm.xlu0 %58, %v48
  %v60 = vpop.permute.xlu0 %59
  %v63 = vlaneseq
  %v64 = vshrl.u32 %v63, 7
  %v65 = vsub.s32 0, %v64
  %v66 = vrot.slane %v51, %v65
  %v67 = vlaneseq
  %v68 = vshrl.u32 %v67, 7
  %v69 = vsub.s32 1, %v68
  %v70 = vrot.slane %v51, %v69
  %v73 = vmul.f32 %v55, %v66
  %v74 = vmul.f32 %v55, %v70
  %v75 = vmul.f32 %v60, %v66
  %v76 = vmul.f32 %v60, %v70
  %77 = vset.pattern.permute.xlu0 6
  %78 = vperm.xlu0 %77, %v47
  %v79 = vpop.permute.xlu0 %78
  %81 = vset.pattern.permute.xlu0 6
  %82 = vperm.xlu0 %81, %v48
  %v83 = vpop.permute.xlu0 %82
  %v85 = vadd.f32 %v73, %v79
  %v86 = vadd.f32 %v74, %v79
  %v87 = vadd.f32 %v75, %v83
  %v88 = vadd.f32 %v76, %v83
  %s89 = scalar_lea.vmem %s30, 1
  %v90 = vld [vmem:[%s89] ss:$8 sm:$0x3]
  %91 = vset.pattern.permute.xlu0 1
  %92 = vperm.xlu0 %91, %v47
  %v93 = vpop.permute.xlu0 %92
  %95 = vset.pattern.permute.xlu0 1
  %96 = vperm.xlu0 %95, %v48
  %v97 = vpop.permute.xlu0 %96
  %v100 = vlaneseq
  %v101 = vshrl.u32 %v100, 7
  %v102 = vsub.s32 0, %v101
  %v103 = vrot.slane %v90, %v102
  %v104 = vlaneseq
  %v105 = vshrl.u32 %v104, 7
  %v106 = vsub.s32 1, %v105
  %v107 = vrot.slane %v90, %v106
  %v110 = vmul.f32 %v93, %v103
  %v111 = vmul.f32 %v93, %v107
  %v112 = vmul.f32 %v97, %v103
  %v113 = vmul.f32 %v97, %v107
  %v114 = vadd.f32 %v85, %v110
  %v115 = vadd.f32 %v86, %v111
  %v116 = vadd.f32 %v87, %v112
  %v117 = vadd.f32 %v88, %v113
  %s118 = scalar_lea.vmem %s30, 2
  %v119 = vld [vmem:[%s118] ss:$8 sm:$0x3]
  %120 = vset.pattern.permute.xlu0 2
  %121 = vperm.xlu0 %120, %v47
  %v122 = vpop.permute.xlu0 %121
  %124 = vset.pattern.permute.xlu0 2
  %125 = vperm.xlu0 %124, %v48
  %v126 = vpop.permute.xlu0 %125
  %v129 = vlaneseq
  %v130 = vshrl.u32 %v129, 7
  %v131 = vsub.s32 0, %v130
  %v132 = vrot.slane %v119, %v131
  %v133 = vlaneseq
  %v134 = vshrl.u32 %v133, 7
  %v135 = vsub.s32 1, %v134
  %v136 = vrot.slane %v119, %v135
  %v139 = vmul.f32 %v122, %v132
  %v140 = vmul.f32 %v122, %v136
  %v141 = vmul.f32 %v126, %v132
  %v142 = vmul.f32 %v126, %v136
  %v143 = vadd.f32 %v114, %v139
  %v144 = vadd.f32 %v115, %v140
  %v145 = vadd.f32 %v116, %v141
  %v146 = vadd.f32 %v117, %v142
  %s147 = scalar_lea.vmem %s30, 3
  %v148 = vld [vmem:[%s147] ss:$8 sm:$0x3]
  %149 = vset.pattern.permute.xlu0 3
  %150 = vperm.xlu0 %149, %v47
  %v151 = vpop.permute.xlu0 %150
  %153 = vset.pattern.permute.xlu0 3
  %154 = vperm.xlu0 %153, %v48
  %v155 = vpop.permute.xlu0 %154
  %v158 = vlaneseq
  %v159 = vshrl.u32 %v158, 7
  %v160 = vsub.s32 0, %v159
  %v161 = vrot.slane %v148, %v160
  %v162 = vlaneseq
  %v163 = vshrl.u32 %v162, 7
  %v164 = vsub.s32 1, %v163
  %v165 = vrot.slane %v148, %v164
  %v168 = vmul.f32 %v151, %v161
  %v169 = vmul.f32 %v151, %v165
  %v170 = vmul.f32 %v155, %v161
  %v171 = vmul.f32 %v155, %v165
  %v172 = vadd.f32 %v143, %v168
  %v173 = vadd.f32 %v144, %v169
  %v174 = vadd.f32 %v145, %v170
  %v175 = vadd.f32 %v146, %v171
  %s176 = scalar_lea.vmem %s30, 6
  %v177 = vld [vmem:[%s176] ss:$8 sm:$0x3]
  %v179 = vlaneseq
  %v180 = vshrl.u32 %v179, 7
  %v181 = vsub.s32 0, %v180
  %v182 = vrot.slane %v177, %v181
  %v183 = vlaneseq
  %v184 = vshrl.u32 %v183, 7
  %v185 = vsub.s32 1, %v184
  %v186 = vrot.slane %v177, %v185
  %v189 = vmul.f32 %v151, %v182
  %v190 = vmul.f32 %v151, %v186
  %v191 = vmul.f32 %v155, %v182
  %v192 = vmul.f32 %v155, %v186
  %v193 = vadd.f32 %v143, %v189
  %v194 = vadd.f32 %v144, %v190
  %v195 = vadd.f32 %v145, %v191
  %v196 = vadd.f32 %v146, %v192
  %s197 = scalar_lea.vmem %s30, 4
  %v198 = vld [vmem:[%s197] ss:$8 sm:$0x3]
  %199 = vset.pattern.permute.xlu0 4
  %200 = vperm.xlu0 %199, %v47
  %v201 = vpop.permute.xlu0 %200
  %203 = vset.pattern.permute.xlu0 4
  %204 = vperm.xlu0 %203, %v48
  %v205 = vpop.permute.xlu0 %204
  %v208 = vlaneseq
  %v209 = vshrl.u32 %v208, 7
  %v210 = vsub.s32 0, %v209
  %v211 = vrot.slane %v198, %v210
  %v212 = vlaneseq
  %v213 = vshrl.u32 %v212, 7
  %v214 = vsub.s32 1, %v213
  %v215 = vrot.slane %v198, %v214
  %v218 = vmul.f32 %v201, %v211
  %v219 = vmul.f32 %v201, %v215
  %v220 = vmul.f32 %v205, %v211
  %v221 = vmul.f32 %v205, %v215
  %v222 = vadd.f32 %v172, %v218
  %v223 = vadd.f32 %v173, %v219
  %v224 = vadd.f32 %v174, %v220
  %v225 = vadd.f32 %v175, %v221
  %s226 = scalar_lea.vmem %s30, 7
  %v227 = vld [vmem:[%s226] ss:$8 sm:$0x3]
  %v229 = vlaneseq
  %v230 = vshrl.u32 %v229, 7
  %v231 = vsub.s32 0, %v230
  %v232 = vrot.slane %v227, %v231
  %v233 = vlaneseq
  %v234 = vshrl.u32 %v233, 7
  %v235 = vsub.s32 1, %v234
  %v236 = vrot.slane %v227, %v235
  %v239 = vmul.f32 %v201, %v232
  %v240 = vmul.f32 %v201, %v236
  %v241 = vmul.f32 %v205, %v232
  %v242 = vmul.f32 %v205, %v236
  %v243 = vadd.f32 %v193, %v239
  %v244 = vadd.f32 %v194, %v240
  %v245 = vadd.f32 %v195, %v241
  %v246 = vadd.f32 %v196, %v242
  %s247 = scalar_lea.vmem %s30, 5
  %v248 = vld [vmem:[%s247] ss:$8 sm:$0x3]
  %249 = vset.pattern.permute.xlu0 5
  %250 = vperm.xlu0 %249, %v47
  %v251 = vpop.permute.xlu0 %250
  %253 = vset.pattern.permute.xlu0 5
  %254 = vperm.xlu0 %253, %v48
  %v255 = vpop.permute.xlu0 %254
  %v258 = vlaneseq
  %v259 = vshrl.u32 %v258, 7
  %v260 = vsub.s32 0, %v259
  %v261 = vrot.slane %v248, %v260
  %v262 = vlaneseq
  %v263 = vshrl.u32 %v262, 7
  %v264 = vsub.s32 1, %v263
  %v265 = vrot.slane %v248, %v264
  %v268 = vmul.f32 %v251, %v261
  %v269 = vmul.f32 %v251, %v265
  %v270 = vmul.f32 %v255, %v261
  %v271 = vmul.f32 %v255, %v265
  %v272 = vadd.f32 %v222, %v268
  %v273 = vadd.f32 %v223, %v269
  %v274 = vadd.f32 %v224, %v270
  %v275 = vadd.f32 %v225, %v271
  %s276 = scalar_lea.vmem %s30, 16
  %v277 = vld [vmem:[%s276] ss:$8 sm:$0x3]
  %v279 = vlaneseq
  %v280 = vshrl.u32 %v279, 7
  %v281 = vsub.s32 0, %v280
  %v282 = vrot.slane %v277, %v281
  %v283 = vlaneseq
  %v284 = vshrl.u32 %v283, 7
  %v285 = vsub.s32 1, %v284
  %v286 = vrot.slane %v277, %v285
  %v289 = vmul.f32 %v251, %v282
  %v290 = vmul.f32 %v251, %v286
  %v291 = vmul.f32 %v255, %v282
  %v292 = vmul.f32 %v255, %v286
  %v293 = vadd.f32 %v243, %v289
  %v294 = vadd.f32 %v244, %v290
  %v295 = vadd.f32 %v245, %v291
  %v296 = vadd.f32 %v246, %v292
  %v297 = vmax.f32 %v272, 0.0
  %v298 = vmax.f32 %v273, 0.0
  %v299 = vmax.f32 %v274, 0.0
  %v300 = vmax.f32 %v275, 0.0
  %v301 = vmax.f32 %v293, 0.0
  %v302 = vmax.f32 %v294, 0.0
  %v303 = vmax.f32 %v295, 0.0
  %v304 = vmax.f32 %v296, 0.0
  %v305 = vlaneseq
  %v306 = vand.u32 %v305, 127
  %v307 = vadd.s32 %v306, 128
  %v308 = vstv %s50
  %v309 = vadd.s32 %v308, %v306
  %v310 = vadd.s32 %v308, %v307
  %vm311 = vcmp.lt.s32.totalorder %v309, 8
  %vm312 = vcmp.lt.s32.totalorder %v310, 8
  %v313 = vsel %vm311, %v297, 0.0
  %v314 = vsel %vm312, %v298, 0.0
  %v315 = vsel %vm311, %v299, 0.0
  %v316 = vsel %vm312, %v300, 0.0
  %v317 = vld [vmem:[#allocation2] sm:$0xff]
  %v318 = vld [vmem:[#allocation2 + $0x8] sm:$0xff]
  %v319 = vld [vmem:[#allocation2 + $0x10] sm:$0xff]
  %v320 = vld [vmem:[#allocation2 + $0x18] sm:$0xff]
  %v321 = vadd.f32 %v317, %v313
  %v322 = vadd.f32 %v318, %v314
  %v323 = vadd.f32 %v319, %v315
  %v324 = vadd.f32 %v320, %v316
  %325 = vst [vmem:[#allocation2] sm:$0xff] %v321
  %326 = vst [vmem:[#allocation2 + $0x8] sm:$0xff] %v322
  %327 = vst [vmem:[#allocation2 + $0x10] sm:$0xff] %v323
  %328 = vst [vmem:[#allocation2 + $0x18] sm:$0xff] %v324
  %329 = vset.pattern.permute.xlu0 7
  %330 = vperm.xlu0 %329, %v47
  %v331 = vpop.permute.xlu0 %330
  %333 = vset.pattern.permute.xlu0 7
  %334 = vperm.xlu0 %333, %v48
  %v335 = vpop.permute.xlu0 %334
  %v337 = vmul.f32 %v301, %v331
  %v338 = vmul.f32 %v302, %v331
  %v339 = vmul.f32 %v303, %v335
  %v340 = vmul.f32 %v304, %v335
  %v341 = vadd.f32 %v337, %v339
  %v342 = vrot.slane %v341, 4
  %v343 = vadd.f32 %v341, %v342
  %v344 = vrot.slane %v343, 2
  %v345 = vadd.f32 %v343, %v344
  %v346 = vrot.slane %v345, 1
  %v347 = vadd.f32 %v345, %v346
  %v348 = vadd.f32 %v338, %v340
  %v349 = vrot.slane %v348, 4
  %v350 = vadd.f32 %v348, %v349
  %v351 = vrot.slane %v350, 2
  %v352 = vadd.f32 %v350, %v351
  %v353 = vrot.slane %v352, 1
  %v354 = vadd.f32 %v352, %v353
  %v355 = vsel %vm311, %v347, -1e+30
  %v356 = vsel %vm312, %v354, -1e+30
  %v357 = vld [vmem:[#allocation3] sm:$0x3]
  %v360 = vcombine.low %v355, %v356
  %v362 = vunpack.c.l.s4 1966171168
  %v363 = vunpack.c.0.s8 %v362
  %v364 = vlaneseq
  %v365 = vshrl.u32 %v364, 7
  %v366 = vsub.s32 %v363, %v365
  %v367 = vrot.slane %v360, %v366
  %v369 = vunpack.c.l.s4 1966171168
  %v370 = vunpack.c.0.s8 %v369
  %v371 = vlaneseq
  %v372 = vshrl.u32 %v371, 7
  %v373 = vsub.s32 %v370, %v372
  %v374 = vrot.slane %v367, %v373
  %v376 = vmax.f32 %v357, %v374
  %v377 = vld [vmem:[#allocation4] sm:$0x3]
  %v378 = vsub.f32 %v357, %v376
  %v379 = vmul.f32 %v378, 1.442695
  %v380 = vpow.pop %v379
  %v381 = vmul.f32 %v377, %v380
  %v383 = vlaneseq
  %v384 = vshrl.u32 %v383, 7
  %v385 = vsub.s32 0, %v384
  %v386 = vrot.slane %v376, %v385
  %v387 = vlaneseq
  %v388 = vshrl.u32 %v387, 7
  %v389 = vsub.s32 1, %v388
  %v390 = vrot.slane %v376, %v389
  %v393 = vsub.f32 %v355, %v386
  %v394 = vsub.f32 %v356, %v390
  %v395 = vmul.f32 %v393, 1.442695
  %v396 = vpow.pop %v395
  %v397 = vmul.f32 %v394, 1.442695
  %v398 = vpow.pop %v397
  %v401 = vcombine.low %v396, %v398
  %v403 = vunpack.c.l.s4 1966171168
  %v404 = vunpack.c.0.s8 %v403
  %v405 = vlaneseq
  %v406 = vshrl.u32 %v405, 7
  %v407 = vsub.s32 %v404, %v406
  %v408 = vrot.slane %v401, %v407
  %v410 = vunpack.c.l.s4 1966171168
  %v411 = vunpack.c.0.s8 %v410
  %v412 = vlaneseq
  %v413 = vshrl.u32 %v412, 7
  %v414 = vsub.s32 %v411, %v413
  %v415 = vrot.slane %v408, %v414
  %v417 = vadd.f32 %v381, %v415
  %v418 = vlaneseq
  %vm419 = vcmp.ge.s32.totalorder %v418, 0
  %vm420 = vcmp.lt.s32.totalorder %v418, 256
  %vm421 = vmand %vm419, %vm420
  %422 = vst.msk [vmem:[#allocation4] sm:$0x3] %vm421, %v417
  %423 = vst.msk [vmem:[#allocation3] sm:$0x3] %vm421, %v376
  // Predicated region
  $region14: #{mine_forward.1} parent=0 // pred_check
    %p424 = pneg %p33
  $region15: #{mine_forward.1} parent=0 // pred_check_branch
    %426 = sbr.rel (%p424) target = $region17
  $region16: #{mine_forward.1} parent=0 // pred_region
    %v427 = vld [vmem:[#allocation2] sm:$0xff]
    %v428 = vld [vmem:[#allocation2 + $0x8] sm:$0xff]
    %v429 = vld [vmem:[#allocation2 + $0x10] sm:$0xff]
    %v430 = vld [vmem:[#allocation2 + $0x18] sm:$0xff]
    %v431 = vmul.f32 %v427, %v331
    %v432 = vmul.f32 %v428, %v331
    %v433 = vmul.f32 %v429, %v335
    %v434 = vmul.f32 %v430, %v335
    %v435 = vadd.f32 %v431, %v432
    %v436 = vadd.f32 %v435, %v433
    %v437 = vadd.f32 %v436, %v434
    %438 = vadd.xlane.f32.xlu0 %v437
    %v439 = vpop.xlane.xlu0 %438
    %v440 = vrot.slane %v439, 4
    %v441 = vadd.f32 %v439, %v440
    %v442 = vrot.slane %v441, 2
    %v443 = vadd.f32 %v441, %v442
    %v444 = vrot.slane %v443, 1
    %v445 = vadd.f32 %v443, %v444
    %s446 = vtos %v445
    %v447 = vld [vmem:[#allocation3] sm:$0x3]
    %v449 = vlaneseq
    %v450 = vshrl.u32 %v449, 7
    %v451 = vsub.s32 0, %v450
    %v452 = vrot.slane %v447, %v451
    %v453 = vlaneseq
    %v454 = vshrl.u32 %v453, 7
    %v455 = vsub.s32 1, %v454
    %v456 = vrot.slane %v447, %v455
    %vm459 = vcmask 1040384
    %v460 = vsel %vm459, %v452, -inf
    %v461 = vsel %vm459, %v456, -inf
    %v462 = vmax.f32 %v460, %v461
    %463 = vmax.xlane.f32.xlu0 %v462
    %v464 = vpop.xlane.xlu0 %463
    %v465 = vrot.slane %v464, 4
    %v466 = vmax.f32 %v464, %v465
    %v467 = vrot.slane %v466, 2
    %v468 = vmax.f32 %v466, %v467
    %v469 = vrot.slane %v468, 1
    %v470 = vmax.f32 %v468, %v469
    %s471 = vtos %v470
    %v472 = vld [vmem:[#allocation4] sm:$0x3]
    %v473 = vstv %s471
    %v474 = vsub.f32 %v447, %v473
    %v475 = vmul.f32 %v474, 1.442695
    %v476 = vpow.pop %v475
    %v477 = vmul.f32 %v472, %v476
    %v479 = vlaneseq
    %v480 = vshrl.u32 %v479, 7
    %v481 = vsub.s32 0, %v480
    %v482 = vrot.slane %v477, %v481
    %v483 = vlaneseq
    %v484 = vshrl.u32 %v483, 7
    %v485 = vsub.s32 1, %v484
    %v486 = vrot.slane %v477, %v485
    %v489 = vsel %vm459, %v482, 0.0
    %v490 = vsel %vm459, %v486, 0.0
    %v491 = vadd.f32 %v489, %v490
    %492 = vadd.xlane.f32.xlu0 %v491
    %v493 = vpop.xlane.xlu0 %492
    %v494 = vrot.slane %v493, 4
    %v495 = vadd.f32 %v493, %v494
    %v496 = vrot.slane %v495, 2
    %v497 = vadd.f32 %v495, %v496
    %v498 = vrot.slane %v497, 1
    %v499 = vadd.f32 %v497, %v498
    %s500 = vtos %v499
    %vm501 = vcmp.eq.s32.totalorder %v306, 0
    %vm502 = vcmp.eq.s32.totalorder %v306, 1
    %vm503 = vcmp.eq.s32.totalorder %v306, 2
    %v504 = vstv %s500
    %v505 = vsel %vm503, %v504, 0.0
    %v506 = vsel %vm502, %v473, %v505
    %v507 = vstv %s446
    %v508 = vsel %vm501, %v507, %v506
    %509 = vst [vmem:[%s2] sm:$0xff] %v508
  $region17: #{mine_forward.1} parent=0 // pred_fallthru
    _
  // Predicated region
  $region18: #{mine_forward.1} parent=0 // pred_check
    _
  $region19: #{mine_forward.1} parent=0 // pred_check_branch
    %511 = sbr.rel (0) target = $region21
  $region20: #{mine_forward.1} parent=0 // pred_region
    _
  $region21: #{mine_forward.1} parent=0 // pred_fallthru
    _
  // Predicated region
  $region22: #{mine_forward.1} parent=0 // pred_check
    _
  $region23: #{mine_forward.1} parent=0 // pred_check_branch
    %513 = sbr.rel (0) target = $region25
  $region24: #{mine_forward.1} parent=0 // pred_region
    _
  $region25: #{mine_forward.1} parent=0 // pred_fallthru
    _

</llo_original>
